<compile_context>
chip_gen: v5e
topology: v5e:2x2
jax: 0.10.0
libtpu: 0.0.40
codegen_flags: <defaults>
</compile_context>

<pallas_src>
import jax
import jax.numpy as jnp
from jax.experimental import pallas as pl
from jax.experimental.pallas import tpu as pltpu


def mix_coeff_mlp_kernel(x_ref, w1_ref, b1_ref, w2_ref, b2_ref, o_ref):
    # x_ref: (TN, L, C) with C on the lane axis.
    # Global average pool: sum over L (1/L already folded into w1); f32 accum.
    pooled = jnp.sum(x_ref[...].astype(jnp.float32), axis=1)          # (TN, C)

    # dense1 + ReLU (MXU, f32 accumulate; bias kept in f32).
    h = jnp.dot(pooled.astype(w1_ref.dtype), w1_ref[...],
                preferred_element_type=jnp.float32) + b1_ref[...]     # (TN, units)
    h = jnp.maximum(h, 0.0)

    # dense2 (output columns padded to lane width in the wrapper).
    out = jnp.dot(h.astype(w2_ref.dtype), w2_ref[...],
                  preferred_element_type=jnp.float32) + b2_ref[...]   # (TN, T_pad)
    o_ref[...] = out.astype(o_ref.dtype)


def mix_coeff_mlp(x_ncl, w1, b1, w2, b2, *, block_n=128,
                  compute_dtype=jnp.float32):
    """x_ncl: (N, C, L); w1: (C, units); b1: (units,); w2: (units, T); b2: (T,)."""
    N, C, L = x_ncl.shape
    units = w1.shape[1]
    num_tasks = w2.shape[1]

    # (1) Lane-dense layout for x: C on the lane axis.
    x_c = jnp.transpose(x_ncl, (0, 2, 1)).astype(compute_dtype)       # (N, L, C)

    # (2) Fold 1/L of the mean pool into w1 (biases stay f32).
    w1_s = (w1.astype(jnp.float32) * (1.0 / L)).astype(compute_dtype)  # (C, units)
    w2_c = w2.astype(compute_dtype)                                    # (units, T)
    b1_f = b1.astype(jnp.float32).reshape(1, units)
    b2_f = b2.astype(jnp.float32).reshape(1, num_tasks)

    # (3) Lane-dense output: pad num_tasks up to a multiple of 128.
    t_pad = ((num_tasks + 127) // 128) * 128
    if t_pad != num_tasks:
        w2_c = jnp.pad(w2_c, ((0, 0), (0, t_pad - num_tasks)))
        b2_f = jnp.pad(b2_f, ((0, 0), (0, t_pad - num_tasks)))

    # (4) Batch grid: pad N to a multiple of the batch tile.
    tn = min(block_n, N)
    n_pad = ((N + tn - 1) // tn) * tn
    if n_pad != N:
        x_c = jnp.pad(x_c, ((0, n_pad - N), (0, 0), (0, 0)))
    grid = (n_pad // tn,)

    out = pl.pallas_call(
        mix_coeff_mlp_kernel,
        out_shape=jax.ShapeDtypeStruct((n_pad, t_pad), jnp.float32),
        grid_spec=pltpu.PrefetchScalarGridSpec(
            num_scalar_prefetch=0,
            grid=grid,
            in_specs=[
                pl.BlockSpec((tn, L, C), lambda i: (i, 0, 0)),     # x (pipelined)
                pl.BlockSpec((C, units), lambda i: (0, 0)),        # w1 (resident)
                pl.BlockSpec((1, units), lambda i: (0, 0)),        # b1 (resident)
                pl.BlockSpec((units, t_pad), lambda i: (0, 0)),    # w2 (resident)
                pl.BlockSpec((1, t_pad), lambda i: (0, 0)),        # b2 (resident)
            ],
            out_specs=pl.BlockSpec((tn, t_pad), lambda i: (i, 0)),
        ),
        compiler_params=pltpu.CompilerParams(
            dimension_semantics=("parallel",),   # megacore sharding on v7x
        ),
    )(x_c, w1_s, b1_f, w2_c, b2_f)

    return out[:N, :num_tasks]


def reference(x, w1, b1, w2, b2):
    pooled = jnp.mean(x, axis=-1)
    h = jnp.maximum(pooled @ w1 + b1, 0.0)
    return h @ w2 + b2


if __name__ == "__main__":
    # Small, module-consistent shapes: batch 16, channels 32, seq len 16.
    N, C, L = 16, 32, 16
    units, num_tasks = 128, 4

    key = jax.random.PRNGKey(0)
    kx, k1, kb1, k2, kb2 = jax.random.split(key, 5)

    x = jax.random.normal(kx, (N, C, L), dtype=jnp.float32)
    w1 = jax.random.normal(k1, (C, units), dtype=jnp.float32) * 0.05
    b1 = jax.random.normal(kb1, (units,), dtype=jnp.float32) * 0.01
    w2 = jax.random.normal(k2, (units, num_tasks), dtype=jnp.float32) * 0.05
    b2 = jax.random.normal(kb2, (num_tasks,), dtype=jnp.float32) * 0.01

    ref = reference(x, w1, b1, w2, b2)

    # f32 path; block_n=8 exercises a 2-step batch grid at this toy size.
    out = mix_coeff_mlp(x, w1, b1, w2, b2, block_n=8)
    jax.block_until_ready(out)
    assert out.shape == (N, num_tasks), out.shape
    assert jnp.allclose(out, ref, atol=1e-4, rtol=1e-4), "f32 mismatch vs reference"

    # bf16-operand path (v6e/v7x production config): f32 pooling/accumulation.
    out_bf16 = mix_coeff_mlp(x, w1, b1, w2, b2, block_n=8,
                             compute_dtype=jnp.bfloat16)
    jax.block_until_ready(out_bf16)
    assert jnp.allclose(out_bf16, ref, atol=5e-2, rtol=5e-2), "bf16 mismatch vs reference"

    print("KERNEL_OK")
</pallas_src>

<mosaic_0001>
module attributes {stable_mosaic.version = 11 : i64} {
  func.func @mix_coeff_mlp_kernel(%arg0: i32, %arg1: memref<8x16x32xf32, #tpu.memory_space<vmem>>, %arg2: memref<32x128xf32, #tpu.memory_space<vmem>>, %arg3: memref<1x128xf32, #tpu.memory_space<vmem>>, %arg4: memref<128x128xf32, #tpu.memory_space<vmem>>, %arg5: memref<1x128xf32, #tpu.memory_space<vmem>>, %arg6: memref<8x128xf32, #tpu.memory_space<vmem>>) attributes {dimension_semantics = [#tpu.dimension_semantics<parallel>], iteration_bounds = array<i64: 2>, scalar_prefetch = 0 : i64, scratch_operands = 0 : i64, tpu.core_type = #tpu.core_type<tc>, window_params = [{transform_indices = @transform_0, window_bounds = array<i64: 8, 16, 32>}, {pipeline_mode = #tpu.pipeline_mode<synchronous>, transform_indices = @transform_1, window_bounds = array<i64: 32, 128>}, {pipeline_mode = #tpu.pipeline_mode<synchronous>, transform_indices = @transform_2, window_bounds = array<i64: 1, 128>}, {pipeline_mode = #tpu.pipeline_mode<synchronous>, transform_indices = @transform_3, window_bounds = array<i64: 128, 128>}, {pipeline_mode = #tpu.pipeline_mode<synchronous>, transform_indices = @transform_4, window_bounds = array<i64: 1, 128>}, {transform_indices = @transform_5, window_bounds = array<i64: 8, 128>}]} {
    %c0 = arith.constant 0 : index
    %c0_0 = arith.constant 0 : index
    %c0_1 = arith.constant 0 : index
    %0 = vector.load %arg1[%c0, %c0_0, %c0_1] : memref<8x16x32xf32, #tpu.memory_space<vmem>>, vector<8x16x32xf32>
    %cst = arith.constant dense<0.000000e+00> : vector<8x32xf32>
    %1 = vector.multi_reduction <add>, %0, %cst [1] : vector<8x16x32xf32> to vector<8x32xf32>
    %c0_2 = arith.constant 0 : index
    %c0_3 = arith.constant 0 : index
    %2 = vector.load %arg2[%c0_2, %c0_3] : memref<32x128xf32, #tpu.memory_space<vmem>>, vector<32x128xf32>
    %cst_4 = arith.constant dense<0.000000e+00> : vector<8x128xf32>
    %3 = tpu.matmul %1, %2, %cst_4 {dimension_numbers = #tpu.dot_dimension_numbers<[1], [0], [0], [1], [0, 0, 1, 1], [], []>} : vector<8x32xf32>, vector<32x128xf32>, vector<8x128xf32> -> vector<8x128xf32>
    %c0_5 = arith.constant 0 : index
    %c0_6 = arith.constant 0 : index
    %4 = vector.load %arg3[%c0_5, %c0_6] : memref<1x128xf32, #tpu.memory_space<vmem>>, vector<1x128xf32>
    %5 = vector.broadcast %4 : vector<1x128xf32> to vector<8x128xf32>
    %6 = arith.addf %3, %5 : vector<8x128xf32>
    %cst_7 = arith.constant 0.000000e+00 : f32
    %7 = vector.broadcast %cst_7 : f32 to vector<8x128xf32>
    %8 = arith.maximumf %6, %7 : vector<8x128xf32>
    %c0_8 = arith.constant 0 : index
    %c0_9 = arith.constant 0 : index
    %9 = vector.load %arg4[%c0_8, %c0_9] : memref<128x128xf32, #tpu.memory_space<vmem>>, vector<128x128xf32>
    %cst_10 = arith.constant dense<0.000000e+00> : vector<8x128xf32>
    %10 = tpu.matmul %8, %9, %cst_10 {dimension_numbers = #tpu.dot_dimension_numbers<[1], [0], [0], [1], [0, 0, 1, 1], [], []>} : vector<8x128xf32>, vector<128x128xf32>, vector<8x128xf32> -> vector<8x128xf32>
    %c0_11 = arith.constant 0 : index
    %c0_12 = arith.constant 0 : index
    %11 = vector.load %arg5[%c0_11, %c0_12] : memref<1x128xf32, #tpu.memory_space<vmem>>, vector<1x128xf32>
    %12 = vector.broadcast %11 : vector<1x128xf32> to vector<8x128xf32>
    %13 = arith.addf %10, %12 : vector<8x128xf32>
    %c0_13 = arith.constant 0 : index
    %c0_14 = arith.constant 0 : index
    %14 = vector.load %arg6[%c0_13, %c0_14] : memref<8x128xf32, #tpu.memory_space<vmem>>, vector<8x128xf32>
    tpu.vector_store %arg6[%c0_13, %c0_14], %13 {strides = array<i32>} : memref<8x128xf32, #tpu.memory_space<vmem>>, vector<8x128xf32>,
    return
  }
  func.func @transform_0(%arg0: i32) -> (i32, i32, i32) {
    %c0_i32 = arith.constant 0 : i32
    %c0_i32_0 = arith.constant 0 : i32
    %c0_i32_1 = arith.constant 0 : i32
    return %arg0, %c0_i32, %c0_i32_0 : i32, i32, i32
  }
  func.func @transform_1(%arg0: i32) -> (i32, i32) {
    %c0_i32 = arith.constant 0 : i32
    %c0_i32_0 = arith.constant 0 : i32
    %c0_i32_1 = arith.constant 0 : i32
    return %c0_i32, %c0_i32_0 : i32, i32
  }
  func.func @transform_2(%arg0: i32) -> (i32, i32) {
    %c0_i32 = arith.constant 0 : i32
    %c0_i32_0 = arith.constant 0 : i32
    %c0_i32_1 = arith.constant 0 : i32
    return %c0_i32, %c0_i32_0 : i32, i32
  }
  func.func @transform_3(%arg0: i32) -> (i32, i32) {
    %c0_i32 = arith.constant 0 : i32
    %c0_i32_0 = arith.constant 0 : i32
    %c0_i32_1 = arith.constant 0 : i32
    return %c0_i32, %c0_i32_0 : i32, i32
  }
  func.func @transform_4(%arg0: i32) -> (i32, i32) {
    %c0_i32 = arith.constant 0 : i32
    %c0_i32_0 = arith.constant 0 : i32
    %c0_i32_1 = arith.constant 0 : i32
    return %c0_i32, %c0_i32_0 : i32, i32
  }
  func.func @transform_5(%arg0: i32) -> (i32, i32) {
    %c0_i32 = arith.constant 0 : i32
    %c0_i32_0 = arith.constant 0 : i32
    return %arg0, %c0_i32 : i32, i32
  }
}

</mosaic_0001>

<llo_original>
// kernel: tpu_custom_call.1
$region0: #{tpu_custom_call.1}
  #allocation0 [shape = 'u32[]', space=smem, size = 0x4, offset = 0x4, fixed_abs, tag = 'smem constant byte address 0x4 - core index']
  #allocation1 [shape = 'u32[72,128]{1,0:T(1,128)}', space=vmem, size = 0x9000, scoped, tag = 'internal scratch']
  %s0 = inlined_call_operand.hbm [shape: f32[16,16,32], index: 0, kind: input, shape index: {}]
  %s1 = inlined_call_operand.hbm [shape: f32[32,128], index: 1, kind: input, shape index: {}]
  %s2 = inlined_call_operand.vmem [shape: f32[1,128], index: 2, kind: input, shape index: {}]
  %s3 = inlined_call_operand.hbm [shape: f32[128,128], index: 3, kind: input, shape index: {}]
  %s4 = inlined_call_operand.vmem [shape: f32[1,128], index: 4, kind: input, shape index: {}]
  %s5 = inlined_call_operand.hbm [shape: f32[16,128], index: 5, kind: output, shape index: {}]
  %s6 = sld [smem:[#allocation0]]
  $region65: #{tpu_custom_call.1} parent=0
    _
  %s8 = ssub.s32 1, %s6
  %s9 = scalar_select 0, %s8, %s6
  $region1: #{tpu_custom_call.1} parent=0
    #allocation2 [shape = 'u8[131072]{0}', space=vmem, size = 0x20000, scoped, tag = 'input window, operand 0']
    #allocation3 [shape = 's32[2]{0}', space=sflag, size = 0x8, scoped, tag = 'scoped memory for tpu_custom_call.1']
    #allocation4 [shape = 's32[2]{0}', space=sflag, size = 0x8, scoped, tag = 'scoped memory for tpu_custom_call.1']
    #allocation5 [shape = 'u8[16384]{0}', space=vmem, size = 0x4000, scoped, tag = 'input window, operand 1, single buffered']
    #allocation6 [shape = 's32[1]{0}', space=sflag, size = 0x4, scoped, tag = 'scoped memory for tpu_custom_call.1']
    #allocation7 [shape = 'u8[65536]{0}', space=vmem, size = 0x10000, scoped, tag = 'input window, operand 3, single buffered']
    #allocation8 [shape = 'u8[8192]{0}', space=vmem, size = 0x2000, scoped, tag = 'output window, operand 0']
    %10 = vsyncpa [#allocation3], 0
    %s11 = scalar_lea.sflag [#allocation3], 1
    %12 = vsyncpa %s11, 0
    %13 = vsyncpa [#allocation6], 0
    %14 = vsyncpa [#allocation4], 0
    %s15 = scalar_lea.sflag [#allocation4], 1
    %16 = vsyncpa %s15, 0
    loop: start=0, step=1, limit=4
    $region2: #{tpu_custom_call.1} parent=1 // loop_pre_header
      _
    $region3: #{tpu_custom_call.1} parent=1 // loop_header
      %s18 = sphi 0, %s22
      %p19 = scmp.ge.s32.totalorder %s18, 4
      %s28 = sphi 0, %s30
      %s31 = sphi 0, %s28
      %s32 = sphi 0, %s31
      %s48 = sphi 0, %s32
      %s52 = sphi 0, %s52
      %s54 = sphi 0, %s52
      %s55 = sphi 0, %s54
      %s69 = sphi 0, %s55
      %s73 = sphi 0, %s73
      %s75 = sphi 0, %s73
      %s76 = sphi 0, %s75
      %s90 = sphi 0, %s76
      %s94 = sphi 0, %s94
      %s96 = sphi 0, %s94
      %s97 = sphi 0, %s96
      %s111 = sphi 0, %s97
      %s115 = sphi 0, %s115
      %s117 = sphi 0, %s115
      %s118 = sphi 0, %s117
      %s132 = sphi 0, %s118
      %s138 = sphi 0, %s140
      %s141 = sphi 0, %s138
      %s142 = sphi 0, %s141
      %s158 = sphi 0, %s142
    $region4: #{tpu_custom_call.1} parent=1 // loop_header_branch
      %21 = sbr.rel (%p19) target = $region8
    $region5: #{tpu_custom_call.1} parent=1 // loop_body
      %s23 = ssub.s32 %s18, 1
      %s24 = ssub.s32 %s18, 2
      %s25 = sadd.s32 %s18, 1
      %s26 = ssub.s32 %s18, %s25
      %p27 = scmp.eq.s32.totalorder %s26, 0
      %s29 = sadd.s32 %s28, 1
      %s30 = scalar_select %p27, %s28, %s29
      %p33 = pneg %p27
      %p34 = scmp.eq.s32.totalorder %s18, 1
      %p35 = por %p33, %p34
      %p36 = scmp.ne.s32.totalorder %s28, %s31
      %p37 = scmp.eq.s32.totalorder %s18, 0
      %p38 = por %p36, %p37
      %p39 = scmp.ne.s32.totalorder %s28, %s31
      %p40 = scmp.eq.s32.totalorder %s23, 1
      %p41 = por %p39, %p40
      %p42 = scmp.ne.s32.totalorder %s31, %s32
      %p43 = scmp.eq.s32.totalorder %s23, 0
      %p44 = por %p42, %p43
      %p45 = scmp.ne.s32.totalorder %s31, %s32
      %p46 = scmp.eq.s32.totalorder %s24, 1
      %p47 = por %p45, %p46
      %p49 = scmp.ne.s32.totalorder %s32, %s48
      %p50 = scmp.eq.s32.totalorder %s24, 0
      %p51 = por %p49, %p50
      %s53 = sadd.s32 %s52, 1
      %p56 = scmp.eq.s32.totalorder %s18, 1
      %p57 = scmp.ne.s32.totalorder %s52, %s54
      %p58 = scmp.eq.s32.totalorder %s18, 0
      %p59 = por %p57, %p58
      %p60 = scmp.ne.s32.totalorder %s52, %s54
      %p61 = scmp.eq.s32.totalorder %s23, 1
      %p62 = por %p60, %p61
      %p63 = scmp.ne.s32.totalorder %s54, %s55
      %p64 = scmp.eq.s32.totalorder %s23, 0
      %p65 = por %p63, %p64
      %p66 = scmp.ne.s32.totalorder %s54, %s55
      %p67 = scmp.eq.s32.totalorder %s24, 1
      %p68 = por %p66, %p67
      %p70 = scmp.ne.s32.totalorder %s55, %s69
      %p71 = scmp.eq.s32.totalorder %s24, 0
      %p72 = por %p70, %p71
      %s74 = sadd.s32 %s73, 1
      %p77 = scmp.eq.s32.totalorder %s18, 1
      %p78 = scmp.ne.s32.totalorder %s73, %s75
      %p79 = scmp.eq.s32.totalorder %s18, 0
      %p80 = por %p78, %p79
      %p81 = scmp.ne.s32.totalorder %s73, %s75
      %p82 = scmp.eq.s32.totalorder %s23, 1
      %p83 = por %p81, %p82
      %p84 = scmp.ne.s32.totalorder %s75, %s76
      %p85 = scmp.eq.s32.totalorder %s23, 0
      %p86 = por %p84, %p85
      %p87 = scmp.ne.s32.totalorder %s75, %s76
      %p88 = scmp.eq.s32.totalorder %s24, 1
      %p89 = por %p87, %p88
      %p91 = scmp.ne.s32.totalorder %s76, %s90
      %p92 = scmp.eq.s32.totalorder %s24, 0
      %p93 = por %p91, %p92
      %s95 = sadd.s32 %s94, 1
      %p98 = scmp.eq.s32.totalorder %s18, 1
      %p99 = scmp.ne.s32.totalorder %s94, %s96
      %p100 = scmp.eq.s32.totalorder %s18, 0
      %p101 = por %p99, %p100
      %p102 = scmp.ne.s32.totalorder %s94, %s96
      %p103 = scmp.eq.s32.totalorder %s23, 1
      %p104 = por %p102, %p103
      %p105 = scmp.ne.s32.totalorder %s96, %s97
      %p106 = scmp.eq.s32.totalorder %s23, 0
      %p107 = por %p105, %p106
      %p108 = scmp.ne.s32.totalorder %s96, %s97
      %p109 = scmp.eq.s32.totalorder %s24, 1
      %p110 = por %p108, %p109
      %p112 = scmp.ne.s32.totalorder %s97, %s111
      %p113 = scmp.eq.s32.totalorder %s24, 0
      %p114 = por %p112, %p113
      %s116 = sadd.s32 %s115, 1
      %p119 = scmp.eq.s32.totalorder %s18, 1
      %p120 = scmp.ne.s32.totalorder %s115, %s117
      %p121 = scmp.eq.s32.totalorder %s18, 0
      %p122 = por %p120, %p121
      %p123 = scmp.ne.s32.totalorder %s115, %s117
      %p124 = scmp.eq.s32.totalorder %s23, 1
      %p125 = por %p123, %p124
      %p126 = scmp.ne.s32.totalorder %s117, %s118
      %p127 = scmp.eq.s32.totalorder %s23, 0
      %p128 = por %p126, %p127
      %p129 = scmp.ne.s32.totalorder %s117, %s118
      %p130 = scmp.eq.s32.totalorder %s24, 1
      %p131 = por %p129, %p130
      %p133 = scmp.ne.s32.totalorder %s118, %s132
      %p134 = scmp.eq.s32.totalorder %s24, 0
      %p135 = por %p133, %p134
      %s136 = ssub.s32 %s18, %s25
      %p137 = scmp.eq.s32.totalorder %s136, 0
      %s139 = sadd.s32 %s138, 1
      %s140 = scalar_select %p137, %s138, %s139
      %p143 = pneg %p137
      %p144 = scmp.eq.s32.totalorder %s18, 1
      %p145 = por %p143, %p144
      %p146 = scmp.ne.s32.totalorder %s138, %s141
      %p147 = scmp.eq.s32.totalorder %s18, 0
      %p148 = por %p146, %p147
      %p149 = scmp.ne.s32.totalorder %s138, %s141
      %p150 = scmp.eq.s32.totalorder %s23, 1
      %p151 = por %p149, %p150
      %p152 = scmp.ne.s32.totalorder %s141, %s142
      %p153 = scmp.eq.s32.totalorder %s23, 0
      %p154 = por %p152, %p153
      %p155 = scmp.ne.s32.totalorder %s141, %s142
      %p156 = scmp.eq.s32.totalorder %s24, 1
      %p157 = por %p155, %p156
      %p159 = scmp.ne.s32.totalorder %s142, %s158
      %p160 = scmp.eq.s32.totalorder %s24, 0
      %p161 = por %p159, %p160
      %p162 = scmp.le.s32.totalorder 1, %s18
      %p163 = scmp.lt.s32.totalorder %s18, 3
      %p164 = pnand %p162, %p163
      %p165 = pneg %p164
      // Predicated region
      $region9: #{tpu_custom_call.1} parent=5 // pred_check
        _
      $region10: #{tpu_custom_call.1} parent=5 // pred_check_branch
        %167 = sbr.rel (%p164) target = $region12
      $region11: #{tpu_custom_call.1} parent=5 // pred_region
        %s168 = ssub.s32 %s18, 1
        // Predicated region
        $region13: #{tpu_custom_call.1} parent=11 // pred_check
          %p169 = pneg %p65
        $region14: #{tpu_custom_call.1} parent=11 // pred_check_branch
          %171 = sbr.rel (%p169) target = $region16
        $region15: #{tpu_custom_call.1} parent=11 // pred_region
          %173 = vsyncadd [#allocation6], 0
          %s174 = sshll.u32 %s1, 4
          %s175 = int_to_ptr.hbm [resolvable:$true] %s174
          %s176 = sshll.u32 [#allocation5], 4
          %s177 = int_to_ptr.vmem [resolvable:$true] %s176
          %182 = dma.hbm_to_vmem [thread:$0]  %s175, 512, %s177, [#allocation6], 128, 128, 8
        $region16: #{tpu_custom_call.1} parent=11 // pred_fallthru
          _
        // Predicated region
        $region17: #{tpu_custom_call.1} parent=11 // pred_check
          %p183 = pneg %p86
        $region18: #{tpu_custom_call.1} parent=11 // pred_check_branch
          %185 = sbr.rel (%p183) target = $region20
        $region19: #{tpu_custom_call.1} parent=11 // pred_region
          _
        $region20: #{tpu_custom_call.1} parent=11 // pred_fallthru
          _
        // Predicated region
        $region21: #{tpu_custom_call.1} parent=11 // pred_check
          %p186 = pneg %p107
        $region22: #{tpu_custom_call.1} parent=11 // pred_check_branch
          %188 = sbr.rel (%p186) target = $region24
        $region23: #{tpu_custom_call.1} parent=11 // pred_region
          %190 = vsyncadd [#allocation6], 0
          %s191 = sshll.u32 %s3, 4
          %s192 = int_to_ptr.hbm [resolvable:$true] %s191
          %s193 = sshll.u32 [#allocation7], 4
          %s194 = int_to_ptr.vmem [resolvable:$true] %s193
          %199 = dma.hbm_to_vmem [thread:$0]  %s192, 2048, %s194, [#allocation6], 128, 128, 8
        $region24: #{tpu_custom_call.1} parent=11 // pred_fallthru
          _
        // Predicated region
        $region25: #{tpu_custom_call.1} parent=11 // pred_check
          %p200 = pneg %p128
        $region26: #{tpu_custom_call.1} parent=11 // pred_check_branch
          %202 = sbr.rel (%p200) target = $region28
        $region27: #{tpu_custom_call.1} parent=11 // pred_region
          _
        $region28: #{tpu_custom_call.1} parent=11 // pred_fallthru
          _
      $region12: #{tpu_custom_call.1} parent=5 // pred_fallthru
        _
      %p203 = scmp.lt.s32.totalorder %s18, 2
      // Predicated region
      $region29: #{tpu_custom_call.1} parent=5 // pred_check
        %p204 = pneg %p203
      $region30: #{tpu_custom_call.1} parent=5 // pred_check_branch
        %206 = sbr.rel (%p204) target = $region32
      $region31: #{tpu_custom_call.1} parent=5 // pred_region
        // Predicated region
        $region33: #{tpu_custom_call.1} parent=31 // pred_check
          %p207 = pneg %p38
        $region34: #{tpu_custom_call.1} parent=31 // pred_check_branch
          %209 = sbr.rel (%p207) target = $region36
        $region35: #{tpu_custom_call.1} parent=31 // pred_region
          %s210 = sand.u32 %s28, 1
          %s211 = scalar_lea.sflag [#allocation3], %s210
          %s212 = sand.u32 %s28, 1
          %s213 = smul.addr %s212, 128
          %s214 = scalar_lea.vmem [#allocation2], %s213
          %s215 = smul.u32 8, %s18
          %217 = vsyncadd %s211, 0
          %s218 = smul.addr %s215, 2
          %s219 = smul.addr %s218, 8
          %s220 = scalar_lea.hbm %s0, %s219
          %s221 = sshll.u32 %s220, 4
          %s222 = int_to_ptr.hbm [resolvable:$true] %s221
          %s223 = sshll.u32 %s214, 4
          %s224 = int_to_ptr.vmem [resolvable:$true] %s223
          %229 = dma.hbm_to_vmem [thread:$0]  %s222, 2048, %s224, %s211, 128, 128, 8
        $region36: #{tpu_custom_call.1} parent=31 // pred_fallthru
          _
      $region32: #{tpu_custom_call.1} parent=5 // pred_fallthru
        _
      %p230 = scmp.le.s32.totalorder 1, %s18
      %p231 = scmp.lt.s32.totalorder %s18, 3
      %p232 = pnand %p230, %p231
      %p233 = pneg %p232
      // Predicated region
      $region37: #{tpu_custom_call.1} parent=5 // pred_check
        _
      $region38: #{tpu_custom_call.1} parent=5 // pred_check_branch
        %235 = sbr.rel (%p232) target = $region40
      $region39: #{tpu_custom_call.1} parent=5 // pred_region
        %s236 = ssub.s32 %s18, 1
        %s237 = sand.u32 %s31, 1
        %s238 = scalar_lea.sflag [#allocation3], %s237
        %s239 = sand.u32 %s31, 1
        %s240 = smul.addr %s239, 128
        %s241 = scalar_lea.vmem [#allocation2], %s240
        // Predicated region
        $region41: #{tpu_custom_call.1} parent=39 // pred_check
          %p242 = pneg %p44
        $region42: #{tpu_custom_call.1} parent=39 // pred_check_branch
          %244 = sbr.rel (%p242) target = $region44
        $region43: #{tpu_custom_call.1} parent=39 // pred_region
          %246 = dma.done %s238, 2048
        $region44: #{tpu_custom_call.1} parent=39 // pred_fallthru
          _
        // Predicated region
        $region45: #{tpu_custom_call.1} parent=39 // pred_check
          %p247 = pneg %p65
        $region46: #{tpu_custom_call.1} parent=39 // pred_check_branch
          %249 = sbr.rel (%p247) target = $region48
        $region47: #{tpu_custom_call.1} parent=39 // pred_region
          %251 = dma.done [#allocation6], 512
        $region48: #{tpu_custom_call.1} parent=39 // pred_fallthru
          _
        // Predicated region
        $region49: #{tpu_custom_call.1} parent=39 // pred_check
          %p252 = pneg %p107
        $region50: #{tpu_custom_call.1} parent=39 // pred_check_branch
          %254 = sbr.rel (%p252) target = $region52
        $region51: #{tpu_custom_call.1} parent=39 // pred_region
          %256 = dma.done [#allocation6], 2048
        $region52: #{tpu_custom_call.1} parent=39 // pred_fallthru
          _
        %s257 = sand.u32 %s31, 1
        %s258 = scalar_lea.sflag [#allocation3], %s257
        %s259 = sand.u32 %s31, 1
        %s260 = smul.addr %s259, 128
        %s261 = scalar_lea.vmem [#allocation2], %s260
        %p262 = pneg %p44
        %p263 = pneg %p41
        %p264 = pneg %p65
        %p265 = pneg %p62
        %p266 = pneg %p86
        %p267 = pneg %p83
        %p268 = pneg %p107
        %p269 = pneg %p104
        %p270 = pneg %p128
        %p271 = pneg %p125
        %p272 = pneg %p154
        %p273 = pneg %p151
        %s274 = sand.u32 %s141, 1
        %s275 = scalar_lea.sflag [#allocation4], %s274
        %s276 = sand.u32 %s141, 1
        %s277 = smul.addr %s276, 8
        %s278 = scalar_lea.vmem [#allocation8], %s277
        %s279 = smul.u32 8, %s23
        %v280 = vld [vmem:[%s241] sm:$0xff]
        %v281 = vld [vmem:[%s241 + $0x8] sm:$0xff]
        %v282 = vld [vmem:[%s241 + $0x10] sm:$0xff]
        %v283 = vld [vmem:[%s241 + $0x18] sm:$0xff]
        %v284 = vld [vmem:[%s241 + $0x20] sm:$0xff]
        %v285 = vld [vmem:[%s241 + $0x28] sm:$0xff]
        %v286 = vld [vmem:[%s241 + $0x30] sm:$0xff]
        %v287 = vld [vmem:[%s241 + $0x38] sm:$0xff]
        %v288 = vld [vmem:[%s241 + $0x40] sm:$0xff]
        %v289 = vld [vmem:[%s241 + $0x48] sm:$0xff]
        %v290 = vld [vmem:[%s241 + $0x50] sm:$0xff]
        %v291 = vld [vmem:[%s241 + $0x58] sm:$0xff]
        %v292 = vld [vmem:[%s241 + $0x60] sm:$0xff]
        %v293 = vld [vmem:[%s241 + $0x68] sm:$0xff]
        %v294 = vld [vmem:[%s241 + $0x70] sm:$0xff]
        %v295 = vld [vmem:[%s241 + $0x78] sm:$0xff]
        %vm296 = vcmask 261120
        %v297 = vsel %vm296, %v280, 0.0
        %v298 = vsel %vm296, %v281, 0.0
        %v299 = vadd.f32 %v297, %v298
        %v300 = vrot.slane %v299, 4
        %v301 = vadd.f32 %v299, %v300
        %v302 = vrot.slane %v301, 2
        %v303 = vadd.f32 %v301, %v302
        %v304 = vrot.slane %v303, 1
        %v305 = vadd.f32 %v303, %v304
        %v306 = vsel %vm296, %v282, 0.0
        %v307 = vsel %vm296, %v283, 0.0
        %v308 = vadd.f32 %v306, %v307
        %v309 = vrot.slane %v308, 4
        %v310 = vadd.f32 %v308, %v309
        %v311 = vrot.slane %v310, 2
        %v312 = vadd.f32 %v310, %v311
        %v313 = vrot.slane %v312, 1
        %v314 = vadd.f32 %v312, %v313
        %v315 = vsel %vm296, %v284, 0.0
        %v316 = vsel %vm296, %v285, 0.0
        %v317 = vadd.f32 %v315, %v316
        %v318 = vrot.slane %v317, 4
        %v319 = vadd.f32 %v317, %v318
        %v320 = vrot.slane %v319, 2
        %v321 = vadd.f32 %v319, %v320
        %v322 = vrot.slane %v321, 1
        %v323 = vadd.f32 %v321, %v322
        %v324 = vsel %vm296, %v286, 0.0
        %v325 = vsel %vm296, %v287, 0.0
        %v326 = vadd.f32 %v324, %v325
        %v327 = vrot.slane %v326, 4
        %v328 = vadd.f32 %v326, %v327
        %v329 = vrot.slane %v328, 2
        %v330 = vadd.f32 %v328, %v329
        %v331 = vrot.slane %v330, 1
        %v332 = vadd.f32 %v330, %v331
        %v333 = vsel %vm296, %v288, 0.0
        %v334 = vsel %vm296, %v289, 0.0
        %v335 = vadd.f32 %v333, %v334
        %v336 = vrot.slane %v335, 4
        %v337 = vadd.f32 %v335, %v336
        %v338 = vrot.slane %v337, 2
        %v339 = vadd.f32 %v337, %v338
        %v340 = vrot.slane %v339, 1
        %v341 = vadd.f32 %v339, %v340
        %v342 = vsel %vm296, %v290, 0.0
        %v343 = vsel %vm296, %v291, 0.0
        %v344 = vadd.f32 %v342, %v343
        %v345 = vrot.slane %v344, 4
        %v346 = vadd.f32 %v344, %v345
        %v347 = vrot.slane %v346, 2
        %v348 = vadd.f32 %v346, %v347
        %v349 = vrot.slane %v348, 1
        %v350 = vadd.f32 %v348, %v349
        %v351 = vsel %vm296, %v292, 0.0
        %v352 = vsel %vm296, %v293, 0.0
        %v353 = vadd.f32 %v351, %v352
        %v354 = vrot.slane %v353, 4
        %v355 = vadd.f32 %v353, %v354
        %v356 = vrot.slane %v355, 2
        %v357 = vadd.f32 %v355, %v356
        %v358 = vrot.slane %v357, 1
        %v359 = vadd.f32 %v357, %v358
        %v360 = vsel %vm296, %v294, 0.0
        %v361 = vsel %vm296, %v295, 0.0
        %v362 = vadd.f32 %v360, %v361
        %v363 = vrot.slane %v362, 4
        %v364 = vadd.f32 %v362, %v363
        %v365 = vrot.slane %v364, 2
        %v366 = vadd.f32 %v364, %v365
        %v367 = vrot.slane %v366, 1
        %v368 = vadd.f32 %v366, %v367
        %v369 = vld [vmem:[#allocation5] sm:$0xff]
        %v370 = vld [vmem:[#allocation5 + $0x8] sm:$0xff]
        %v371 = vld [vmem:[#allocation5 + $0x10] sm:$0xff]
        %v372 = vld [vmem:[#allocation5 + $0x18] sm:$0xff]
        %v373 = vld [vmem:[%s2] sm:$0x1]
        %v375 = vperm.slane %v373, 0
        %vm385 = vcmask 1041409
        %v386 = vsel %vm385, %v314, %v305
        %vm387 = vcmask 1042434
        %v388 = vsel %vm387, %v323, %v386
        %vm389 = vcmask 1043459
        %v390 = vsel %vm389, %v332, %v388
        %vm391 = vcmask 1044484
        %v392 = vsel %vm391, %v341, %v390
        %vm393 = vcmask 1045509
        %v394 = vsel %vm393, %v350, %v392
        %vm395 = vcmask 1046534
        %v396 = vsel %vm395, %v359, %v394
        %vm397 = vcmask 1047559
        %v398 = vsel %vm397, %v368, %v396
        %v399 = vsel %vm296, %v398, 0
        %401 = vmatpush.msra.mxu0 0.0
        %402 = vmatpush.msra.mxu0 0.0
        %403 = vmatpush.msra.mxu0 0.0
        %404 = vmatpush.msra.mxu0 0.0
        %405 = vmatpush.msra.mxu0 0.0
        %406 = vmatpush.msra.mxu0 0.0
        %407 = vmatpush.msra.mxu0 0.0
        %408 = vmatpush.msra.mxu0 0.0
        %409 = vmatpush.msra.mxu0 0.0
        %410 = vmatpush.msra.mxu0 0.0
        %411 = vmatpush.msra.mxu0 0.0
        %412 = vmatpush.msra.mxu0 0.0
        %413 = vmatpush.msra.mxu0 %v372
        %414 = vmatpush.msra.mxu0 %v371
        %415 = vmatpush.msra.mxu0 %v370
        %416 = vmatpush.msra.mxu0 %v369
        %417 = vmatmul.f32.gmra.mxu0 %v399
        %v418 = vpop.f32.mrf.mxu0
        %v419 = vadd.f32 %v375, %v418
        %420 = vdwg.mxu0
        %v421 = vmax.f32 %v419, 0.0
        %v422 = vld [vmem:[#allocation7] sm:$0xff]
        %v423 = vld [vmem:[#allocation7 + $0x8] sm:$0xff]
        %v424 = vld [vmem:[#allocation7 + $0x10] sm:$0xff]
        %v425 = vld [vmem:[#allocation7 + $0x18] sm:$0xff]
        %v426 = vld [vmem:[#allocation7 + $0x20] sm:$0xff]
        %v427 = vld [vmem:[#allocation7 + $0x28] sm:$0xff]
        %v428 = vld [vmem:[#allocation7 + $0x30] sm:$0xff]
        %v429 = vld [vmem:[#allocation7 + $0x38] sm:$0xff]
        %v430 = vld [vmem:[#allocation7 + $0x40] sm:$0xff]
        %v431 = vld [vmem:[#allocation7 + $0x48] sm:$0xff]
        %v432 = vld [vmem:[#allocation7 + $0x50] sm:$0xff]
        %v433 = vld [vmem:[#allocation7 + $0x58] sm:$0xff]
        %v434 = vld [vmem:[#allocation7 + $0x60] sm:$0xff]
        %v435 = vld [vmem:[#allocation7 + $0x68] sm:$0xff]
        %v436 = vld [vmem:[#allocation7 + $0x70] sm:$0xff]
        %v437 = vld [vmem:[#allocation7 + $0x78] sm:$0xff]
        %v438 = vld [vmem:[%s4] sm:$0x1]
        %v440 = vperm.slane %v438, 0
        %442 = vmatpush.msra.mxu0 %v437
        %443 = vmatpush.msra.mxu0 %v436
        %444 = vmatpush.msra.mxu0 %v435
        %445 = vmatpush.msra.mxu0 %v434
        %446 = vmatpush.msra.mxu0 %v433
        %447 = vmatpush.msra.mxu0 %v432
        %448 = vmatpush.msra.mxu0 %v431
        %449 = vmatpush.msra.mxu0 %v430
        %450 = vmatpush.msra.mxu0 %v429
        %451 = vmatpush.msra.mxu0 %v428
        %452 = vmatpush.msra.mxu0 %v427
        %453 = vmatpush.msra.mxu0 %v426
        %454 = vmatpush.msra.mxu0 %v425
        %455 = vmatpush.msra.mxu0 %v424
        %456 = vmatpush.msra.mxu0 %v423
        %457 = vmatpush.msra.mxu0 %v422
        %458 = vmatmul.f32.gmra.mxu0 %v421
        %v459 = vpop.f32.mrf.mxu0
        %v460 = vadd.f32 %v440, %v459
        %461 = vdwg.mxu0
        %462 = vst [vmem:[%s278] sm:$0xff] %v460
        %s463 = sand.u32 %s141, 1
        %s464 = scalar_lea.sflag [#allocation4], %s463
        %s465 = sand.u32 %s141, 1
        %s466 = smul.addr %s465, 8
        %s467 = scalar_lea.vmem [#allocation8], %s466
        // Predicated region
        $region53: #{tpu_custom_call.1} parent=39 // pred_check
          %p468 = pneg %p151
        $region54: #{tpu_custom_call.1} parent=39 // pred_check_branch
          %470 = sbr.rel (%p468) target = $region56
        $region55: #{tpu_custom_call.1} parent=39 // pred_region
          %472 = vsyncadd %s464, 0
          %s473 = smul.addr %s23, 8
          %s474 = scalar_lea.hbm %s5, %s473
          %s476 = sshll.u32 %s467, 4
          %s477 = int_to_ptr.vmem [resolvable:$true] %s476
          %s478 = sshll.u32 %s474, 4
          %s479 = int_to_ptr.hbm [resolvable:$true] %s478
          %481 = dma.vmem_to_hbm [thread:$0]  %s477, 128, %s479, %s464
        $region56: #{tpu_custom_call.1} parent=39 // pred_fallthru
          _
      $region40: #{tpu_custom_call.1} parent=5 // pred_fallthru
        _
      %p482 = scmp.le.s32.totalorder 2, %s18
      // Predicated region
      $region57: #{tpu_custom_call.1} parent=5 // pred_check
        %p483 = pneg %p482
      $region58: #{tpu_custom_call.1} parent=5 // pred_check_branch
        %485 = sbr.rel (%p483) target = $region60
      $region59: #{tpu_custom_call.1} parent=5 // pred_region
        %s486 = ssub.s32 %s18, 2
        // Predicated region
        $region61: #{tpu_custom_call.1} parent=59 // pred_check
          %p487 = pneg %p157
        $region62: #{tpu_custom_call.1} parent=59 // pred_check_branch
          %489 = sbr.rel (%p487) target = $region64
        $region63: #{tpu_custom_call.1} parent=59 // pred_region
          %s490 = sand.u32 %s142, 1
          %s491 = scalar_lea.sflag [#allocation4], %s490
          %s492 = sand.u32 %s142, 1
          %s493 = smul.addr %s492, 8
          %s494 = scalar_lea.vmem [#allocation8], %s493
          %496 = dma.done %s491, 128
        $region64: #{tpu_custom_call.1} parent=59 // pred_fallthru
          _
      $region60: #{tpu_custom_call.1} parent=5 // pred_fallthru
        _
    $region6: #{tpu_custom_call.1} parent=1 // loop_footer
      %s22 = sadd.s32 1, %s18
    $region7: #{tpu_custom_call.1} parent=1 // loop_footer_branch
      %17 = sbr.rel target = $region3
    $region8: #{tpu_custom_call.1} parent=1 // loop_exit
      _
    %497 = vsyncpa [#allocation3], 1
    %s498 = scalar_lea.sflag [#allocation3], 1
    %499 = vsyncpa %s498, 1
    %500 = vsyncpa [#allocation6], 1
    %501 = vsyncpa [#allocation4], 1
    %s502 = scalar_lea.sflag [#allocation4], 1
    %503 = vsyncpa %s502, 1

</llo_original>
